<compile_context>
chip_gen: v7x
topology: tpu7x:2x2x1
jax: 0.10.0
libtpu: 0.0.40
codegen_flags: <defaults>
</compile_context>

<pallas_src>
import jax
import jax.numpy as jnp
from jax.experimental import pallas as pl
from jax.experimental.pallas import tpu as pltpu


def _round_up(x: int, m: int) -> int:
    return (x + m - 1) // m * m


def _gcn_bsr_kernel(nb_ref, cnt_ref, adj_ref, emb_ref, out_ref):
    """One (row-block i, k-step): out[i] += adj[i, nb[i,k]] @ emb[nb[i,k]]."""
    i = pl.program_id(0)
    k = pl.program_id(1)

    @pl.when(k == 0)
    def _init():
        out_ref[...] = jnp.zeros_like(out_ref)

    # Only the first cnt[i] steps correspond to nonzero adj blocks; padded
    # steps repeat the last valid block index (no new DMA) and skip compute.
    @pl.when(k < cnt_ref[i])
    def _accum():
        out_ref[...] += jnp.dot(
            adj_ref[...], emb_ref[...], preferred_element_type=jnp.float32
        )


def gcn_layer(adj: jax.Array, embeds: jax.Array, *, tm: int = 512, tk: int = 1024):
    """Computes adj @ embeds (torch.spmm semantics) with a block-sparse
    Pallas TPU matmul. Returns float32 [N, D]."""
    N, K = adj.shape
    K2, D = embeds.shape
    assert K == K2, "adj columns must match embeds rows"

    # Clamp tiles for small problems; keep MXU/lane-friendly multiples.
    tm = max(128, min(tm, _round_up(N, 256)))
    tk = max(128, min(tk, _round_up(K, 256)))
    assert tm % 8 == 0 and tk % 128 == 0

    Np = _round_up(N, tm)
    Kp = _round_up(K, tk)
    Dp = _round_up(D, 128)
    nI = Np // tm
    nK = Kp // tk

    adj_p = jnp.pad(adj.astype(jnp.float32), ((0, Np - N), (0, Kp - K)))
    emb_p = jnp.pad(embeds.astype(jnp.float32), ((0, Kp - K), (0, Dp - D)))

    # ---- block-CSR metadata (shape-static, computed outside the kernel) ----
    blk_nz = (adj_p.reshape(nI, tm, nK, tk) != 0.0).any(axis=(1, 3))  # [nI, nK]
    cnt = blk_nz.sum(axis=1).astype(jnp.int32)                        # [nI]
    col = jnp.arange(nK, dtype=jnp.int32)
    # Sort so nonzero block-column indices come first (in increasing order).
    sort_key = jnp.where(blk_nz, col, col + nK)
    order = jnp.argsort(sort_key, axis=1).astype(jnp.int32)           # [nI, nK]
    last = order[jnp.arange(nI), jnp.maximum(cnt - 1, 0)]             # [nI]
    nb_idx = jnp.where(col[None, :] < cnt[:, None], order, last[:, None])
    nb_idx = nb_idx.astype(jnp.int32)                                 # [nI, nK]

    # bf16 inputs halve HBM bytes on the dominant adj stream (f32 accumulate).
    adj_b = adj_p.astype(jnp.bfloat16)
    emb_b = emb_p.astype(jnp.bfloat16)

    flops = 2 * Np * Kp * Dp  # dense upper bound (advisory)
    bytes_accessed = adj_b.size * 2 + emb_b.size * 2 + Np * Dp * 4

    out_p = pl.pallas_call(
        _gcn_bsr_kernel,
        out_shape=jax.ShapeDtypeStruct((Np, Dp), jnp.float32),
        grid_spec=pltpu.PrefetchScalarGridSpec(
            num_scalar_prefetch=2,
            grid=(nI, nK),
            in_specs=[
                # adj row-block i, column-block taken from prefetched block-CSR
                pl.BlockSpec((tm, tk), lambda i, k, nb_r, cnt_r: (i, nb_r[i, k])),
                # matching embeds row-block, full embedding width (tn = D)
                pl.BlockSpec((tk, Dp), lambda i, k, nb_r, cnt_r: (nb_r[i, k], 0)),
            ],
            out_specs=pl.BlockSpec((tm, Dp), lambda i, k, nb_r, cnt_r: (i, 0)),
        ),
        compiler_params=pltpu.CompilerParams(
            dimension_semantics=("parallel", "arbitrary"),
            vmem_limit_bytes=48 * 1024 * 1024,
        ),
        cost_estimate=pl.CostEstimate(
            flops=flops, transcendentals=0, bytes_accessed=bytes_accessed
        ),
    )(nb_idx, cnt, adj_b, emb_b)

    return out_p[:N, :D]


if __name__ == "__main__":
    key = jax.random.PRNGKey(0)
    k1, k2, k3, k4, k5, k6 = jax.random.split(key, 6)

    # --- Case 1: block-structured sparse adjacency -------------------------
    # Exercises zero-block skipping, an entirely empty row-block, and a fully
    # dense row-block (small shapes: N=512 nodes, D=128 hidden).
    N, D, B = 512, 128, 128
    nb = N // B
    block_mask = jnp.array(
        [[1, 0, 1, 0],
         [0, 0, 0, 0],
         [1, 1, 1, 1],
         [0, 0, 1, 0]], dtype=jnp.float32)
    assert block_mask.shape == (nb, nb)
    dense_mask = jnp.kron(block_mask, jnp.ones((B, B), jnp.float32))
    elem_mask = (jax.random.uniform(k1, (N, N)) < 0.3).astype(jnp.float32)
    adj = jax.random.uniform(k2, (N, N), dtype=jnp.float32) * dense_mask * elem_mask
    embeds = jax.random.normal(k3, (N, D), dtype=jnp.float32)

    out = jax.block_until_ready(gcn_layer(adj, embeds, tm=128, tk=128))
    ref = adj @ embeds
    assert out.shape == ref.shape
    # bf16 inputs -> relaxed tolerance (f32 accumulation keeps it tight).
    assert jnp.allclose(out, ref, atol=5e-2, rtol=5e-2), float(
        jnp.max(jnp.abs(out - ref))
    )

    # --- Case 2: non-tile-aligned shapes (padding path), default tiles -----
    N2, D2 = 200, 96
    adj2 = jax.random.uniform(k4, (N2, N2), dtype=jnp.float32)
    adj2 = adj2 * (adj2 < 0.1)  # ~10% density
    emb2 = jax.random.normal(k5, (N2, D2), dtype=jnp.float32)
    out2 = jax.block_until_ready(gcn_layer(adj2, emb2))
    ref2 = adj2 @ emb2
    assert out2.shape == ref2.shape
    assert jnp.allclose(out2, ref2, atol=5e-2, rtol=5e-2)

    print("KERNEL_OK")
</pallas_src>

<mosaic_0001>
module attributes {stable_mosaic.version = 11 : i64} {
  func.func @_gcn_bsr_kernel(%arg0: i32, %arg1: i32, %arg2: memref<4x4xi32, #tpu.memory_space<smem>>, %arg3: memref<4xi32, #tpu.memory_space<smem>>, %arg4: memref<128x128xbf16, #tpu.memory_space<vmem>>, %arg5: memref<128x128xbf16, #tpu.memory_space<vmem>>, %arg6: memref<128x128xf32, #tpu.memory_space<vmem>>) attributes {dimension_semantics = [#tpu.dimension_semantics<parallel>, #tpu.dimension_semantics<arbitrary>], iteration_bounds = array<i64: 4, 4>, scalar_prefetch = 2 : i64, scratch_operands = 0 : i64, tpu.core_type = #tpu.core_type<tc>, window_params = [{transform_indices = @transform_0, window_bounds = array<i64: 128, 128>}, {transform_indices = @transform_1, window_bounds = array<i64: 128, 128>}, {transform_indices = @transform_2, window_bounds = array<i64: 128, 128>}]} {
    %c0_i32 = arith.constant 0 : i32
    %0 = arith.cmpi eq, %arg1, %c0_i32 : i32
    %1 = arith.extui %0 : i1 to i32
    %c0_i32_0 = arith.constant 0 : i32
    %2 = arith.cmpi ne, %1, %c0_i32_0 : i32
    scf.if %2 {
      %cst = arith.constant 0.000000e+00 : f32
      %8 = vector.broadcast %cst : f32 to vector<128x128xf32>
      %c0 = arith.constant 0 : index
      %c0_2 = arith.constant 0 : index
      %9 = vector.load %arg6[%c0, %c0_2] : memref<128x128xf32, #tpu.memory_space<vmem>>, vector<128x128xf32>
      tpu.vector_store %arg6[%c0, %c0_2], %8 {strides = array<i32>} : memref<128x128xf32, #tpu.memory_space<vmem>>, vector<128x128xf32>,
    } else {
    }
    %3 = arith.index_cast %arg0 : i32 to index
    %4 = memref.load %arg3[%3] : memref<4xi32, #tpu.memory_space<smem>>
    %5 = arith.cmpi slt, %arg1, %4 : i32
    %6 = arith.extui %5 : i1 to i32
    %c0_i32_1 = arith.constant 0 : i32
    %7 = arith.cmpi ne, %6, %c0_i32_1 : i32
    scf.if %7 {
      %c0 = arith.constant 0 : index
      %c0_2 = arith.constant 0 : index
      %8 = vector.load %arg6[%c0, %c0_2] : memref<128x128xf32, #tpu.memory_space<vmem>>, vector<128x128xf32>
      %c0_3 = arith.constant 0 : index
      %c0_4 = arith.constant 0 : index
      %9 = vector.load %arg4[%c0_3, %c0_4] : memref<128x128xbf16, #tpu.memory_space<vmem>>, vector<128x128xbf16>
      %c0_5 = arith.constant 0 : index
      %c0_6 = arith.constant 0 : index
      %10 = vector.load %arg5[%c0_5, %c0_6] : memref<128x128xbf16, #tpu.memory_space<vmem>>, vector<128x128xbf16>
      %cst = arith.constant dense<0.000000e+00> : vector<128x128xf32>
      %11 = tpu.matmul %9, %10, %cst {dimension_numbers = #tpu.dot_dimension_numbers<[1], [0], [0], [1], [0, 0, 1, 1], [], []>} : vector<128x128xbf16>, vector<128x128xbf16>, vector<128x128xf32> -> vector<128x128xf32>
      %12 = arith.addf %8, %11 : vector<128x128xf32>
      %c0_7 = arith.constant 0 : index
      %c0_8 = arith.constant 0 : index
      %13 = vector.load %arg6[%c0_7, %c0_8] : memref<128x128xf32, #tpu.memory_space<vmem>>, vector<128x128xf32>
      tpu.vector_store %arg6[%c0_7, %c0_8], %12 {strides = array<i32>} : memref<128x128xf32, #tpu.memory_space<vmem>>, vector<128x128xf32>,
    } else {
    }
    return
  }
  func.func @transform_0(%arg0: i32, %arg1: i32, %arg2: memref<4x4xi32, #tpu.memory_space<smem>>, %arg3: memref<4xi32, #tpu.memory_space<smem>>) -> (i32, i32) {
    %0 = arith.index_cast %arg0 : i32 to index
    %1 = arith.index_cast %arg1 : i32 to index
    %2 = memref.load %arg2[%0, %1] : memref<4x4xi32, #tpu.memory_space<smem>>
    %c0_i32 = arith.constant 0 : i32
    return %arg0, %2 : i32, i32
  }
  func.func @transform_1(%arg0: i32, %arg1: i32, %arg2: memref<4x4xi32, #tpu.memory_space<smem>>, %arg3: memref<4xi32, #tpu.memory_space<smem>>) -> (i32, i32) {
    %0 = arith.index_cast %arg0 : i32 to index
    %1 = arith.index_cast %arg1 : i32 to index
    %2 = memref.load %arg2[%0, %1] : memref<4x4xi32, #tpu.memory_space<smem>>
    %c0_i32 = arith.constant 0 : i32
    %c0_i32_0 = arith.constant 0 : i32
    return %2, %c0_i32 : i32, i32
  }
  func.func @transform_2(%arg0: i32, %arg1: i32, %arg2: memref<4x4xi32, #tpu.memory_space<smem>>, %arg3: memref<4xi32, #tpu.memory_space<smem>>) -> (i32, i32) {
    %c0_i32 = arith.constant 0 : i32
    %c0_i32_0 = arith.constant 0 : i32
    return %arg0, %c0_i32 : i32, i32
  }
}

</mosaic_0001>

<llo_original>
// kernel: tpu_custom_call.1
$region0: #{tpu_custom_call.1}
  #allocation0 [shape = 'u32[]', space=smem, size = 0x4, offset = 0x4, fixed_abs, tag = 'smem constant byte address 0x4 - core index']
  #allocation1 [shape = 'u32[144,128]{1,0:T(1,128)}', space=vmem, size = 0x12000, scoped, tag = 'internal scratch']
  #allocation2 [shape = 's32[1]{0}', space=sflag, size = 0x4, scoped, tag = 'scoped memory for tpu_custom_call.1']
  #allocation3 [shape = 'u8[2048]{0}', space=smem, size = 0x800, scoped, tag = 'prefetched SMEM operand 0']
  #allocation4 [shape = 'u8[512]{0}', space=smem, size = 0x200, scoped, tag = 'prefetched SMEM operand 1']
  %s0 = inlined_call_operand.hbm [shape: s32[4,4], index: 0, kind: input, shape index: {}]
  %s1 = inlined_call_operand.vmem [shape: s32[4], index: 1, kind: input, shape index: {}]
  %s2 = inlined_call_operand.hbm [shape: bf16[512,512], index: 2, kind: input, shape index: {}]
  %s3 = inlined_call_operand.hbm [shape: bf16[512,128], index: 3, kind: input, shape index: {}]
  %s4 = inlined_call_operand.hbm [shape: f32[512,128], index: 4, kind: output, shape index: {}]
  %s5 = sld [smem:[#allocation0]]
  $region57: #{tpu_custom_call.1} parent=0
    _
  %s7 = ssub.s32 1, %s5
  %s8 = scalar_select 0, %s7, %s5
  %10 = dma.hbm_to_smem %s0, 64, [#allocation3], [#allocation2]
  %s11 = sshll.u32 %s1, 4
  %s12 = int_to_ptr.vmem [resolvable:$true] %s11
  %14 = dma.vmem_to_smem %s12, 16, [#allocation4], [#allocation2]
  %15 = dma.done [#allocation2], 80
  %16 = sfence
  $region1: #{tpu_custom_call.1} parent=0
    #allocation5 [shape = 'u8[65536]{0}', space=vmem, size = 0x10000, scoped, tag = 'input window, operand 2']
    #allocation6 [shape = 's32[2]{0}', space=sflag, size = 0x8, scoped, tag = 'scoped memory for tpu_custom_call.1']
    #allocation7 [shape = 's32[2]{0}', space=sflag, size = 0x8, scoped, tag = 'scoped memory for tpu_custom_call.1']
    #allocation8 [shape = 'u8[65536]{0}', space=vmem, size = 0x10000, scoped, tag = 'input window, operand 3']
    #allocation9 [shape = 's32[2]{0}', space=sflag, size = 0x8, scoped, tag = 'scoped memory for tpu_custom_call.1']
    #allocation10 [shape = 'u8[131072]{0}', space=vmem, size = 0x20000, scoped, tag = 'output window, operand 0']
    %17 = vsyncpa [#allocation6], 0
    %s18 = scalar_lea.sflag [#allocation6], 1
    %19 = vsyncpa %s18, 0
    %20 = vsyncpa [#allocation9], 0
    %s21 = scalar_lea.sflag [#allocation9], 1
    %22 = vsyncpa %s21, 0
    %23 = vsyncpa [#allocation7], 0
    %s24 = scalar_lea.sflag [#allocation7], 1
    %25 = vsyncpa %s24, 0
    loop: start=0, step=1, limit=18
    $region2: #{tpu_custom_call.1} parent=1 // loop_pre_header
      _
    $region3: #{tpu_custom_call.1} parent=1 // loop_header
      %s27 = sphi 0, %s31
      %p28 = scmp.ge.s32.totalorder %s27, 18
      %s34 = sphi 0, %s46
      %s35 = sphi 0, %s42
      %s36 = sphi 0, %s34
      %s37 = sphi 0, %s35
      %s38 = sphi 0, %s36
      %s39 = sphi 0, %s37
      %s67 = sphi 0, %s69
      %s70 = sphi 0, %s67
      %s71 = sphi 0, %s70
      %s87 = sphi 0, %s71
      %s109 = sphi 0, %s111
      %s112 = sphi 0, %s109
      %s113 = sphi 0, %s112
      %s129 = sphi 0, %s113
      %s135 = sphi 0, %s137
      %s138 = sphi 0, %s135
      %s139 = sphi 0, %s138
      %s155 = sphi 0, %s139
    $region4: #{tpu_custom_call.1} parent=1 // loop_header_branch
      %30 = sbr.rel (%p28) target = $region8
    $region5: #{tpu_custom_call.1} parent=1 // loop_body
      %s32 = ssub.s32 %s27, 1
      %s33 = ssub.s32 %s27, 2
      %s40 = sadd.s32 1, %s35
      %p41 = scmp.ge.s32.totalorder %s40, 4
      %s42 = scalar_select %p41, 0, %s40
      %s43 = sadd.s32 1, %s34
      %s44 = scalar_select %p41, %s43, %s34
      %p45 = scmp.ge.s32.totalorder %s44, 4
      %s46 = scalar_select %p45, 0, %s44
      %s47 = sshra.s32 %s35, 7
      %s48 = sand.u32 %s35, 127
      %s49 = sadd.s32 %s47, %s34
      %s50 = smul.u32 %s49, 128
      %s51 = sshra.s32 %s35, 7
      %s52 = sand.u32 %s35, 127
      %s53 = sadd.s32 %s50, %s52
      %s54 = sld [smem:[#allocation3 + %s53]]
      %s55 = sshra.s32 %s42, 7
      %s56 = sand.u32 %s42, 127
      %s57 = sadd.s32 %s55, %s46
      %s58 = smul.u32 %s57, 128
      %s59 = sshra.s32 %s42, 7
      %s60 = sand.u32 %s42, 127
      %s61 = sadd.s32 %s58, %s60
      %s62 = sld [smem:[#allocation3 + %s61]]
      %s63 = ssub.s32 %s34, %s46
      %s64 = ssub.s32 %s54, %s62
      %s65 = sor.u32 %s63, %s64
      %p66 = scmp.eq.s32.totalorder %s65, 0
      %s68 = sadd.s32 %s67, 1
      %s69 = scalar_select %p66, %s67, %s68
      %p72 = pneg %p66
      %p73 = scmp.eq.s32.totalorder %s27, 15
      %p74 = por %p72, %p73
      %p75 = scmp.ne.s32.totalorder %s67, %s70
      %p76 = scmp.eq.s32.totalorder %s27, 0
      %p77 = por %p75, %p76
      %p78 = scmp.ne.s32.totalorder %s67, %s70
      %p79 = scmp.eq.s32.totalorder %s32, 15
      %p80 = por %p78, %p79
      %p81 = scmp.ne.s32.totalorder %s70, %s71
      %p82 = scmp.eq.s32.totalorder %s32, 0
      %p83 = por %p81, %p82
      %p84 = scmp.ne.s32.totalorder %s70, %s71
      %p85 = scmp.eq.s32.totalorder %s33, 15
      %p86 = por %p84, %p85
      %p88 = scmp.ne.s32.totalorder %s71, %s87
      %p89 = scmp.eq.s32.totalorder %s33, 0
      %p90 = por %p88, %p89
      %s91 = sshra.s32 %s35, 7
      %s92 = sand.u32 %s35, 127
      %s93 = sadd.s32 %s91, %s34
      %s94 = smul.u32 %s93, 128
      %s95 = sshra.s32 %s35, 7
      %s96 = sand.u32 %s35, 127
      %s97 = sadd.s32 %s94, %s96
      %s98 = sld [smem:[#allocation3 + %s97]]
      %s99 = sshra.s32 %s42, 7
      %s100 = sand.u32 %s42, 127
      %s101 = sadd.s32 %s99, %s46
      %s102 = smul.u32 %s101, 128
      %s103 = sshra.s32 %s42, 7
      %s104 = sand.u32 %s42, 127
      %s105 = sadd.s32 %s102, %s104
      %s106 = sld [smem:[#allocation3 + %s105]]
      %s107 = ssub.s32 %s98, %s106
      %p108 = scmp.eq.s32.totalorder %s107, 0
      %s110 = sadd.s32 %s109, 1
      %s111 = scalar_select %p108, %s109, %s110
      %p114 = pneg %p108
      %p115 = scmp.eq.s32.totalorder %s27, 15
      %p116 = por %p114, %p115
      %p117 = scmp.ne.s32.totalorder %s109, %s112
      %p118 = scmp.eq.s32.totalorder %s27, 0
      %p119 = por %p117, %p118
      %p120 = scmp.ne.s32.totalorder %s109, %s112
      %p121 = scmp.eq.s32.totalorder %s32, 15
      %p122 = por %p120, %p121
      %p123 = scmp.ne.s32.totalorder %s112, %s113
      %p124 = scmp.eq.s32.totalorder %s32, 0
      %p125 = por %p123, %p124
      %p126 = scmp.ne.s32.totalorder %s112, %s113
      %p127 = scmp.eq.s32.totalorder %s33, 15
      %p128 = por %p126, %p127
      %p130 = scmp.ne.s32.totalorder %s113, %s129
      %p131 = scmp.eq.s32.totalorder %s33, 0
      %p132 = por %p130, %p131
      %s133 = ssub.s32 %s34, %s46
      %p134 = scmp.eq.s32.totalorder %s133, 0
      %s136 = sadd.s32 %s135, 1
      %s137 = scalar_select %p134, %s135, %s136
      %p140 = pneg %p134
      %p141 = scmp.eq.s32.totalorder %s27, 15
      %p142 = por %p140, %p141
      %p143 = scmp.ne.s32.totalorder %s135, %s138
      %p144 = scmp.eq.s32.totalorder %s27, 0
      %p145 = por %p143, %p144
      %p146 = scmp.ne.s32.totalorder %s135, %s138
      %p147 = scmp.eq.s32.totalorder %s32, 15
      %p148 = por %p146, %p147
      %p149 = scmp.ne.s32.totalorder %s138, %s139
      %p150 = scmp.eq.s32.totalorder %s32, 0
      %p151 = por %p149, %p150
      %p152 = scmp.ne.s32.totalorder %s138, %s139
      %p153 = scmp.eq.s32.totalorder %s33, 15
      %p154 = por %p152, %p153
      %p156 = scmp.ne.s32.totalorder %s139, %s155
      %p157 = scmp.eq.s32.totalorder %s33, 0
      %p158 = por %p156, %p157
      %p159 = scmp.le.s32.totalorder 1, %s27
      %p160 = scmp.lt.s32.totalorder %s27, 17
      %p161 = pnand %p159, %p160
      %p162 = pneg %p161
      // Predicated region
      $region9: #{tpu_custom_call.1} parent=5 // pred_check
        _
      $region10: #{tpu_custom_call.1} parent=5 // pred_check_branch
        %164 = sbr.rel (%p161) target = $region12
      $region11: #{tpu_custom_call.1} parent=5 // pred_region
        %s165 = ssub.s32 %s27, 1
      $region12: #{tpu_custom_call.1} parent=5 // pred_fallthru
        _
      %p166 = scmp.lt.s32.totalorder %s27, 16
      // Predicated region
      $region13: #{tpu_custom_call.1} parent=5 // pred_check
        %p167 = pneg %p166
      $region14: #{tpu_custom_call.1} parent=5 // pred_check_branch
        %169 = sbr.rel (%p167) target = $region16
      $region15: #{tpu_custom_call.1} parent=5 // pred_region
        // Predicated region
        $region17: #{tpu_custom_call.1} parent=15 // pred_check
          %p170 = pneg %p77
        $region18: #{tpu_custom_call.1} parent=15 // pred_check_branch
          %172 = sbr.rel (%p170) target = $region20
        $region19: #{tpu_custom_call.1} parent=15 // pred_region
          %s173 = sand.u32 %s67, 1
          %s174 = scalar_lea.sflag [#allocation6], %s173
          %s175 = sand.u32 %s67, 1
          %s176 = smul.addr %s175, 64
          %s177 = scalar_lea.vmem [#allocation5], %s176
          %s178 = sshra.s32 %s35, 7
          %s179 = sand.u32 %s35, 127
          %s180 = sadd.s32 %s178, %s34
          %s181 = smul.u32 %s180, 128
          %s182 = sshra.s32 %s35, 7
          %s183 = sand.u32 %s35, 127
          %s184 = sadd.s32 %s181, %s183
          %s185 = sld [smem:[#allocation3 + %s184]]
          %s186 = smul.u32 16, %s34
          %s188 = ssub.s32 1024, 1024
          %189 = vsyncadd %s174, %s188
          %s190 = smul.addr %s186, 4
          %s191 = sadd.s32 %s185, %s190
          %s192 = smul.addr %s191, 64
          %s193 = scalar_lea.hbm %s2, %s192
          %s194 = sshll.u32 %s177, 4
          %s195 = int_to_ptr.vmem [resolvable:$true] %s194
          %200 = dma.hbm_to_vmem [thread:$0]  %s193, 1024, %s195, %s174, 256, 64, 4
        $region20: #{tpu_custom_call.1} parent=15 // pred_fallthru
          _
        // Predicated region
        $region21: #{tpu_custom_call.1} parent=15 // pred_check
          %p201 = pneg %p119
        $region22: #{tpu_custom_call.1} parent=15 // pred_check_branch
          %203 = sbr.rel (%p201) target = $region24
        $region23: #{tpu_custom_call.1} parent=15 // pred_region
          %s204 = sand.u32 %s109, 1
          %s205 = scalar_lea.sflag [#allocation9], %s204
          %s206 = sand.u32 %s109, 1
          %s207 = smul.addr %s206, 64
          %s208 = scalar_lea.vmem [#allocation8], %s207
          %s209 = sshra.s32 %s35, 7
          %s210 = sand.u32 %s35, 127
          %s211 = sadd.s32 %s209, %s34
          %s212 = smul.u32 %s211, 128
          %s213 = sshra.s32 %s35, 7
          %s214 = sand.u32 %s35, 127
          %s215 = sadd.s32 %s212, %s214
          %s216 = sld [smem:[#allocation3 + %s215]]
          %s217 = smul.u32 16, %s216
          %s219 = ssub.s32 1024, 1024
          %220 = vsyncadd %s205, %s219
          %s221 = smul.addr %s217, 64
          %s222 = scalar_lea.hbm %s3, %s221
          %s223 = sshll.u32 %s208, 4
          %s224 = int_to_ptr.vmem [resolvable:$true] %s223
          %229 = dma.hbm_to_vmem [thread:$0]  %s222, 1024, %s224, %s205, 64, 64, 4
        $region24: #{tpu_custom_call.1} parent=15 // pred_fallthru
          _
      $region16: #{tpu_custom_call.1} parent=5 // pred_fallthru
        _
      %p230 = scmp.le.s32.totalorder 1, %s27
      %p231 = scmp.lt.s32.totalorder %s27, 17
      %p232 = pnand %p230, %p231
      %p233 = pneg %p232
      // Predicated region
      $region25: #{tpu_custom_call.1} parent=5 // pred_check
        _
      $region26: #{tpu_custom_call.1} parent=5 // pred_check_branch
        %235 = sbr.rel (%p232) target = $region28
      $region27: #{tpu_custom_call.1} parent=5 // pred_region
        %s236 = ssub.s32 %s27, 1
        %s237 = sand.u32 %s70, 1
        %s238 = scalar_lea.sflag [#allocation6], %s237
        %s239 = sand.u32 %s70, 1
        %s240 = smul.addr %s239, 64
        %s241 = scalar_lea.vmem [#allocation5], %s240
        // Predicated region
        $region29: #{tpu_custom_call.1} parent=27 // pred_check
          %p242 = pneg %p83
        $region30: #{tpu_custom_call.1} parent=27 // pred_check_branch
          %244 = sbr.rel (%p242) target = $region32
        $region31: #{tpu_custom_call.1} parent=27 // pred_region
          %245 = dma.done %s238, 1024
        $region32: #{tpu_custom_call.1} parent=27 // pred_fallthru
          _
        %s246 = sand.u32 %s112, 1
        %s247 = scalar_lea.sflag [#allocation9], %s246
        %s248 = sand.u32 %s112, 1
        %s249 = smul.addr %s248, 64
        %s250 = scalar_lea.vmem [#allocation8], %s249
        // Predicated region
        $region33: #{tpu_custom_call.1} parent=27 // pred_check
          %p251 = pneg %p125
        $region34: #{tpu_custom_call.1} parent=27 // pred_check_branch
          %253 = sbr.rel (%p251) target = $region36
        $region35: #{tpu_custom_call.1} parent=27 // pred_region
          %254 = dma.done %s247, 1024
        $region36: #{tpu_custom_call.1} parent=27 // pred_fallthru
          _
        %s255 = sand.u32 %s70, 1
        %s256 = scalar_lea.sflag [#allocation6], %s255
        %s257 = sand.u32 %s70, 1
        %s258 = smul.addr %s257, 64
        %s259 = scalar_lea.vmem [#allocation5], %s258
        %p260 = pneg %p83
        %p261 = pneg %p80
        %s262 = sand.u32 %s112, 1
        %s263 = scalar_lea.sflag [#allocation9], %s262
        %s264 = sand.u32 %s112, 1
        %s265 = smul.addr %s264, 64
        %s266 = scalar_lea.vmem [#allocation8], %s265
        %p267 = pneg %p125
        %p268 = pneg %p122
        %p269 = pneg %p151
        %p270 = pneg %p148
        %s271 = sand.u32 %s138, 1
        %s272 = scalar_lea.sflag [#allocation7], %s271
        %s273 = sand.u32 %s138, 1
        %s274 = smul.addr %s273, 128
        %s275 = scalar_lea.vmem [#allocation10], %s274
        %s276 = sshra.s32 %s37, 7
        %s277 = sand.u32 %s37, 127
        %s278 = sadd.s32 %s276, %s36
        %s279 = smul.u32 %s278, 128
        %s280 = sshra.s32 %s37, 7
        %s281 = sand.u32 %s37, 127
        %s282 = sadd.s32 %s279, %s281
        %s283 = sld [smem:[#allocation3 + %s282]]
        %s284 = smul.u32 16, %s36
        %s285 = sshra.s32 %s37, 7
        %s286 = sand.u32 %s37, 127
        %s287 = sadd.s32 %s285, %s36
        %s288 = smul.u32 %s287, 128
        %s289 = sshra.s32 %s37, 7
        %s290 = sand.u32 %s37, 127
        %s291 = sadd.s32 %s288, %s290
        %s292 = sld [smem:[#allocation3 + %s291]]
        %s293 = smul.u32 16, %s292
        %s294 = smul.u32 16, %s36
        %p296 = scmp.eq.s32.totalorder %s37, 0
        // Predicated region
        $region37: #{tpu_custom_call.1} parent=27 // pred_check
          %p297 = pneg %p296
        $region38: #{tpu_custom_call.1} parent=27 // pred_check_branch
          %299 = sbr.rel (%p297) target = $region40
        $region39: #{tpu_custom_call.1} parent=27 // pred_region
          %300 = vst [vmem:[%s275] sm:$0xff] 0.0
          %301 = vst [vmem:[%s275 + $0x8] sm:$0xff] 0.0
          %302 = vst [vmem:[%s275 + $0x10] sm:$0xff] 0.0
          %303 = vst [vmem:[%s275 + $0x18] sm:$0xff] 0.0
          %304 = vst [vmem:[%s275 + $0x20] sm:$0xff] 0.0
          %305 = vst [vmem:[%s275 + $0x28] sm:$0xff] 0.0
          %306 = vst [vmem:[%s275 + $0x30] sm:$0xff] 0.0
          %307 = vst [vmem:[%s275 + $0x38] sm:$0xff] 0.0
          %308 = vst [vmem:[%s275 + $0x40] sm:$0xff] 0.0
          %309 = vst [vmem:[%s275 + $0x48] sm:$0xff] 0.0
          %310 = vst [vmem:[%s275 + $0x50] sm:$0xff] 0.0
          %311 = vst [vmem:[%s275 + $0x58] sm:$0xff] 0.0
          %312 = vst [vmem:[%s275 + $0x60] sm:$0xff] 0.0
          %313 = vst [vmem:[%s275 + $0x68] sm:$0xff] 0.0
          %314 = vst [vmem:[%s275 + $0x70] sm:$0xff] 0.0
          %315 = vst [vmem:[%s275 + $0x78] sm:$0xff] 0.0
        $region40: #{tpu_custom_call.1} parent=27 // pred_fallthru
          _
        %s316 = sld [smem:[#allocation4 + %s36]]
        %p317 = scmp.lt.s32.totalorder %s37, %s316
        // Predicated region
        $region41: #{tpu_custom_call.1} parent=27 // pred_check
          %p318 = pneg %p317
        $region42: #{tpu_custom_call.1} parent=27 // pred_check_branch
          %320 = sbr.rel (%p318) target = $region44
        $region43: #{tpu_custom_call.1} parent=27 // pred_region
          %v321 = vld [vmem:[%s275] sm:$0xff]
          %v322 = vld [vmem:[%s275 + $0x8] sm:$0xff]
          %v323 = vld [vmem:[%s275 + $0x10] sm:$0xff]
          %v324 = vld [vmem:[%s275 + $0x18] sm:$0xff]
          %v325 = vld [vmem:[%s275 + $0x20] sm:$0xff]
          %v326 = vld [vmem:[%s275 + $0x28] sm:$0xff]
          %v327 = vld [vmem:[%s275 + $0x30] sm:$0xff]
          %v328 = vld [vmem:[%s275 + $0x38] sm:$0xff]
          %v329 = vld [vmem:[%s275 + $0x40] sm:$0xff]
          %v330 = vld [vmem:[%s275 + $0x48] sm:$0xff]
          %v331 = vld [vmem:[%s275 + $0x50] sm:$0xff]
          %v332 = vld [vmem:[%s275 + $0x58] sm:$0xff]
          %v333 = vld [vmem:[%s275 + $0x60] sm:$0xff]
          %v334 = vld [vmem:[%s275 + $0x68] sm:$0xff]
          %v335 = vld [vmem:[%s275 + $0x70] sm:$0xff]
          %v336 = vld [vmem:[%s275 + $0x78] sm:$0xff]
          %v337 = vld [vmem:[%s241] sm:$0xf]
          %v338 = vld [vmem:[%s241 + $0x4] sm:$0xf]
          %v339 = vld [vmem:[%s241 + $0x8] sm:$0xf]
          %v340 = vld [vmem:[%s241 + $0xc] sm:$0xf]
          %v341 = vld [vmem:[%s241 + $0x10] sm:$0xf]
          %v342 = vld [vmem:[%s241 + $0x14] sm:$0xf]
          %v343 = vld [vmem:[%s241 + $0x18] sm:$0xf]
          %v344 = vld [vmem:[%s241 + $0x1c] sm:$0xf]
          %v345 = vld [vmem:[%s241 + $0x20] sm:$0xf]
          %v346 = vld [vmem:[%s241 + $0x24] sm:$0xf]
          %v347 = vld [vmem:[%s241 + $0x28] sm:$0xf]
          %v348 = vld [vmem:[%s241 + $0x2c] sm:$0xf]
          %v349 = vld [vmem:[%s241 + $0x30] sm:$0xf]
          %v350 = vld [vmem:[%s241 + $0x34] sm:$0xf]
          %v351 = vld [vmem:[%s241 + $0x38] sm:$0xf]
          %v352 = vld [vmem:[%s241 + $0x3c] sm:$0xf]
          %v353 = vld [vmem:[%s250] sm:$0xf]
          %v354 = vld [vmem:[%s250 + $0x4] sm:$0xf]
          %v355 = vld [vmem:[%s250 + $0x8] sm:$0xf]
          %v356 = vld [vmem:[%s250 + $0xc] sm:$0xf]
          %v357 = vld [vmem:[%s250 + $0x10] sm:$0xf]
          %v358 = vld [vmem:[%s250 + $0x14] sm:$0xf]
          %v359 = vld [vmem:[%s250 + $0x18] sm:$0xf]
          %v360 = vld [vmem:[%s250 + $0x1c] sm:$0xf]
          %v361 = vld [vmem:[%s250 + $0x20] sm:$0xf]
          %v362 = vld [vmem:[%s250 + $0x24] sm:$0xf]
          %v363 = vld [vmem:[%s250 + $0x28] sm:$0xf]
          %v364 = vld [vmem:[%s250 + $0x2c] sm:$0xf]
          %v365 = vld [vmem:[%s250 + $0x30] sm:$0xf]
          %v366 = vld [vmem:[%s250 + $0x34] sm:$0xf]
          %v367 = vld [vmem:[%s250 + $0x38] sm:$0xf]
          %v368 = vld [vmem:[%s250 + $0x3c] sm:$0xf]
          %v385 = vunpack.c.l.b16 %v337
          %v386 = vunpack.c.l.b16 %v338
          %v387 = vunpack.c.l.b16 %v339
          %v388 = vunpack.c.l.b16 %v340
          %v389 = vunpack.c.l.b16 %v341
          %v390 = vunpack.c.l.b16 %v342
          %v391 = vunpack.c.l.b16 %v343
          %v392 = vunpack.c.l.b16 %v344
          %v393 = vunpack.c.l.b16 %v345
          %v394 = vunpack.c.l.b16 %v346
          %v395 = vunpack.c.l.b16 %v347
          %v396 = vunpack.c.l.b16 %v348
          %v397 = vunpack.c.l.b16 %v349
          %v398 = vunpack.c.l.b16 %v350
          %v399 = vunpack.c.l.b16 %v351
          %v400 = vunpack.c.l.b16 %v352
          %v401 = vpack.c.b16 %v386, %v385
          %v402 = vpack.c.b16 %v388, %v387
          %v403 = vpack.c.b16 %v390, %v389
          %v404 = vpack.c.b16 %v392, %v391
          %v405 = vpack.c.b16 %v394, %v393
          %v406 = vpack.c.b16 %v396, %v395
          %v407 = vpack.c.b16 %v398, %v397
          %v408 = vpack.c.b16 %v400, %v399
          %v433 = vunpack.c.l.b16 %v353
          %v434 = vunpack.c.l.b16 %v354
          %v435 = vunpack.c.l.b16 %v355
          %v436 = vunpack.c.l.b16 %v356
          %v437 = vunpack.c.l.b16 %v357
          %v438 = vunpack.c.l.b16 %v358
          %v439 = vunpack.c.l.b16 %v359
          %v440 = vunpack.c.l.b16 %v360
          %v441 = vunpack.c.l.b16 %v361
          %v442 = vunpack.c.l.b16 %v362
          %v443 = vunpack.c.l.b16 %v363
          %v444 = vunpack.c.l.b16 %v364
          %v445 = vunpack.c.l.b16 %v365
          %v446 = vunpack.c.l.b16 %v366
          %v447 = vunpack.c.l.b16 %v367
          %v448 = vunpack.c.l.b16 %v368
          %v449 = vpack.c.b16 %v434, %v433
          %v450 = vpack.c.b16 %v436, %v435
          %v451 = vpack.c.b16 %v438, %v437
          %v452 = vpack.c.b16 %v440, %v439
          %v453 = vpack.c.b16 %v442, %v441
          %v454 = vpack.c.b16 %v444, %v443
          %v455 = vpack.c.b16 %v446, %v445
          %v456 = vpack.c.b16 %v448, %v447
          %465 = vmatprep.subr.bf16.mxu0 0
          %466 = vmatpush1.bf16.msra.mxu0 %v449
          %467 = vmatprep.subr.bf16.mxu0 0
          %468 = vmatpush1.bf16.msra.mxu0 %v450
          %469 = vmatprep.subr.bf16.mxu0 0
          %470 = vmatpush1.bf16.msra.mxu0 %v451
          %471 = vmatprep.subr.bf16.mxu0 0
          %472 = vmatpush1.bf16.msra.mxu0 %v452
          %473 = vmatprep.subr.bf16.mxu0 0
          %474 = vmatpush1.bf16.msra.mxu0 %v453
          %475 = vmatprep.subr.bf16.mxu0 0
          %476 = vmatpush1.bf16.msra.mxu0 %v454
          %477 = vmatprep.subr.bf16.mxu0 0
          %478 = vmatpush1.bf16.msra.mxu0 %v455
          %479 = vmatprep.subr.bf16.mxu0 0
          %480 = vmatpush1.bf16.msra.mxu0 %v456
          %481 = vmatprep.subr.bf16.mxu0 0
          %482 = vmatpush1.bf16.msra.mxu0 0
          %483 = vmatprep.subr.bf16.mxu0 0
          %484 = vmatpush1.bf16.msra.mxu0 0
          %485 = vmatprep.subr.bf16.mxu0 0
          %486 = vmatpush1.bf16.msra.mxu0 0
          %487 = vmatprep.subr.bf16.mxu0 0
          %488 = vmatpush1.bf16.msra.mxu0 0
          %489 = vmatprep.subr.bf16.mxu0 0
          %490 = vmatpush1.bf16.msra.mxu0 0
          %491 = vmatprep.subr.bf16.mxu0 0
          %492 = vmatpush1.bf16.msra.mxu0 0
          %493 = vmatprep.subr.bf16.mxu0 0
          %494 = vmatpush1.bf16.msra.mxu0 0
          %495 = vmatprep.subr.bf16.mxu0 0
          %496 = vmatpush1.bf16.msra.mxu0 0
          %497 = vmatprep.mubr.bf16.mxu0 0
          %498 = vmatmul.mubr.bf16.gmra.mrb[0].mxu0 %v401
          %v499 = vpop.f32.mrb[0].mxu0
          %v500 = vadd.f32 0.0, %v499
          %v501 = vpop.f32.mrb[0].mxu0
          %v502 = vpop.f32.mrb[0].mxu0
          %v503 = vadd.f32 0.0, %v502
          %v504 = vpop.f32.mrb[0].mxu0
          %505 = vmatprep.mubr.bf16.mxu0 0
          %506 = vmatmul.mubr.bf16.gmra.mrb[0].mxu0 %v402
          %v507 = vpop.f32.mrb[0].mxu0
          %v508 = vadd.f32 0.0, %v507
          %v509 = vpop.f32.mrb[0].mxu0
          %v510 = vpop.f32.mrb[0].mxu0
          %v511 = vadd.f32 0.0, %v510
          %v512 = vpop.f32.mrb[0].mxu0
          %513 = vmatprep.mubr.bf16.mxu0 0
          %514 = vmatmul.mubr.bf16.gmra.mrb[0].mxu0 %v403
          %v515 = vpop.f32.mrb[0].mxu0
          %v516 = vadd.f32 0.0, %v515
          %v517 = vpop.f32.mrb[0].mxu0
          %v518 = vpop.f32.mrb[0].mxu0
          %v519 = vadd.f32 0.0, %v518
          %v520 = vpop.f32.mrb[0].mxu0
          %521 = vmatprep.mubr.bf16.mxu0 0
          %522 = vmatmul.mubr.bf16.gmra.mrb[0].mxu0 %v404
          %v523 = vpop.f32.mrb[0].mxu0
          %v524 = vadd.f32 0.0, %v523
          %v525 = vpop.f32.mrb[0].mxu0
          %v526 = vpop.f32.mrb[0].mxu0
          %v527 = vadd.f32 0.0, %v526
          %v528 = vpop.f32.mrb[0].mxu0
          %529 = vmatprep.mubr.bf16.mxu0 0
          %530 = vmatmul.mubr.bf16.gmra.mrb[0].mxu0 %v405
          %v531 = vpop.f32.mrb[0].mxu0
          %v532 = vadd.f32 0.0, %v531
          %v533 = vpop.f32.mrb[0].mxu0
          %v534 = vpop.f32.mrb[0].mxu0
          %v535 = vadd.f32 0.0, %v534
          %v536 = vpop.f32.mrb[0].mxu0
          %537 = vmatprep.mubr.bf16.mxu0 0
          %538 = vmatmul.mubr.bf16.gmra.mrb[0].mxu0 %v406
          %v539 = vpop.f32.mrb[0].mxu0
          %v540 = vadd.f32 0.0, %v539
          %v541 = vpop.f32.mrb[0].mxu0
          %v542 = vpop.f32.mrb[0].mxu0
          %v543 = vadd.f32 0.0, %v542
          %v544 = vpop.f32.mrb[0].mxu0
          %545 = vmatprep.mubr.bf16.mxu0 0
          %546 = vmatmul.mubr.bf16.gmra.mrb[0].mxu0 %v407
          %v547 = vpop.f32.mrb[0].mxu0
          %v548 = vadd.f32 0.0, %v547
          %v549 = vpop.f32.mrb[0].mxu0
          %v550 = vpop.f32.mrb[0].mxu0
          %v551 = vadd.f32 0.0, %v550
          %v552 = vpop.f32.mrb[0].mxu0
          %553 = vmatprep.mubr.bf16.mxu0 0
          %554 = vmatmul.mubr.bf16.gmra.mrb[0].mxu0 %v408
          %v555 = vpop.f32.mrb[0].mxu0
          %v556 = vadd.f32 0.0, %v555
          %v557 = vpop.f32.mrb[0].mxu0
          %v558 = vpop.f32.mrb[0].mxu0
          %v559 = vadd.f32 0.0, %v558
          %v560 = vpop.f32.mrb[0].mxu0
          %561 = vdwg.mxu0
          %v562 = vadd.f32 %v321, %v500
          %v563 = vadd.f32 %v322, %v503
          %v564 = vadd.f32 %v323, %v508
          %v565 = vadd.f32 %v324, %v511
          %v566 = vadd.f32 %v325, %v516
          %v567 = vadd.f32 %v326, %v519
          %v568 = vadd.f32 %v327, %v524
          %v569 = vadd.f32 %v328, %v527
          %v570 = vadd.f32 %v329, %v532
          %v571 = vadd.f32 %v330, %v535
          %v572 = vadd.f32 %v331, %v540
          %v573 = vadd.f32 %v332, %v543
          %v574 = vadd.f32 %v333, %v548
          %v575 = vadd.f32 %v334, %v551
          %v576 = vadd.f32 %v335, %v556
          %v577 = vadd.f32 %v336, %v559
          %578 = vst [vmem:[%s275] sm:$0xff] %v562
          %579 = vst [vmem:[%s275 + $0x8] sm:$0xff] %v563
          %580 = vst [vmem:[%s275 + $0x10] sm:$0xff] %v564
          %581 = vst [vmem:[%s275 + $0x18] sm:$0xff] %v565
          %582 = vst [vmem:[%s275 + $0x20] sm:$0xff] %v566
          %583 = vst [vmem:[%s275 + $0x28] sm:$0xff] %v567
          %584 = vst [vmem:[%s275 + $0x30] sm:$0xff] %v568
          %585 = vst [vmem:[%s275 + $0x38] sm:$0xff] %v569
          %586 = vst [vmem:[%s275 + $0x40] sm:$0xff] %v570
          %587 = vst [vmem:[%s275 + $0x48] sm:$0xff] %v571
          %588 = vst [vmem:[%s275 + $0x50] sm:$0xff] %v572
          %589 = vst [vmem:[%s275 + $0x58] sm:$0xff] %v573
          %590 = vst [vmem:[%s275 + $0x60] sm:$0xff] %v574
          %591 = vst [vmem:[%s275 + $0x68] sm:$0xff] %v575
          %592 = vst [vmem:[%s275 + $0x70] sm:$0xff] %v576
          %593 = vst [vmem:[%s275 + $0x78] sm:$0xff] %v577
        $region44: #{tpu_custom_call.1} parent=27 // pred_fallthru
          _
        %s594 = sand.u32 %s138, 1
        %s595 = scalar_lea.sflag [#allocation7], %s594
        %s596 = sand.u32 %s138, 1
        %s597 = smul.addr %s596, 128
        %s598 = scalar_lea.vmem [#allocation10], %s597
        // Predicated region
        $region45: #{tpu_custom_call.1} parent=27 // pred_check
          %p599 = pneg %p148
        $region46: #{tpu_custom_call.1} parent=27 // pred_check_branch
          %601 = sbr.rel (%p599) target = $region48
        $region47: #{tpu_custom_call.1} parent=27 // pred_region
          %s602 = smul.u32 16, %s36
          %s604 = ssub.s32 2048, 2048
          %605 = vsyncadd %s595, %s604
          %s606 = smul.addr %s602, 128
          %s607 = scalar_lea.hbm %s4, %s606
          %s608 = sshll.u32 %s598, 4
          %s609 = int_to_ptr.vmem [resolvable:$true] %s608
          %614 = dma.vmem_to_hbm [thread:$0]  %s609, 2048, %s607, %s595, 128, 128, 8
        $region48: #{tpu_custom_call.1} parent=27 // pred_fallthru
          _
      $region28: #{tpu_custom_call.1} parent=5 // pred_fallthru
        _
      %p615 = scmp.le.s32.totalorder 2, %s27
      // Predicated region
      $region49: #{tpu_custom_call.1} parent=5 // pred_check
        %p616 = pneg %p615
      $region50: #{tpu_custom_call.1} parent=5 // pred_check_branch
        %618 = sbr.rel (%p616) target = $region52
      $region51: #{tpu_custom_call.1} parent=5 // pred_region
        %s619 = ssub.s32 %s27, 2
        // Predicated region
        $region53: #{tpu_custom_call.1} parent=51 // pred_check
          %p620 = pneg %p154
        $region54: #{tpu_custom_call.1} parent=51 // pred_check_branch
          %622 = sbr.rel (%p620) target = $region56
        $region55: #{tpu_custom_call.1} parent=51 // pred_region
          %s623 = sand.u32 %s139, 1
          %s624 = scalar_lea.sflag [#allocation7], %s623
          %s625 = sand.u32 %s139, 1
          %s626 = smul.addr %s625, 128
          %s627 = scalar_lea.vmem [#allocation10], %s626
          %628 = dma.done %s624, 2048
        $region56: #{tpu_custom_call.1} parent=51 // pred_fallthru
          _
      $region52: #{tpu_custom_call.1} parent=5 // pred_fallthru
        _
    $region6: #{tpu_custom_call.1} parent=1 // loop_footer
      %s31 = sadd.s32 1, %s27
    $region7: #{tpu_custom_call.1} parent=1 // loop_footer_branch
      %26 = sbr.rel target = $region3
    $region8: #{tpu_custom_call.1} parent=1 // loop_exit
      _
    %629 = vsyncpa [#allocation6], 1
    %s630 = scalar_lea.sflag [#allocation6], 1
    %631 = vsyncpa %s630, 1
    %632 = vsyncpa [#allocation9], 1
    %s633 = scalar_lea.sflag [#allocation9], 1
    %634 = vsyncpa %s633, 1
    %635 = vsyncpa [#allocation7], 1
    %s636 = scalar_lea.sflag [#allocation7], 1
    %637 = vsyncpa %s636, 1

</llo_original>
